<compile_context>
chip_gen: v6e
topology: v6e:2x2x1
jax: 0.10.0
libtpu: 0.0.40
codegen_flags: <defaults>
</compile_context>

<pallas_src>
import jax
import jax.numpy as jnp
from jax.experimental import pallas as pl
from jax.experimental.pallas import tpu as pltpu

LANE = 128
CHUNK_R = 256          # rows per in-register sub-chunk (256x128 f32 = 32 vregs)


def _device_config():
    """Return (num_cores, tile_r_max, vmem_limit_bytes) per TPU generation."""
    num_cores, tile_r_max, vmem_limit = 1, 4096, None   # safe default (v5e/CPU)
    try:
        kind = jax.devices()[0].device_kind.lower()
    except Exception:
        return num_cores, tile_r_max, vmem_limit
    if "v7" in kind:
        # 2 TCs/chip, ~3.2 TB/s HBM, 64 MiB VMEM: big tiles + megacore split.
        return 2, 8192, 48 * 1024 * 1024
    if "v6" in kind:
        # 1 TC, 32 MiB scoped-VMEM default: 4 MiB tiles double-buffered fit.
        return 1, 8192, None
    # v5e / v5p / unknown: conservative (16 MiB scoped-VMEM default on v5e).
    return 1, 4096, None


def _make_charbonnier_kernel(eps, rows, tile_r, chunk_r, inner_blocks,
                             needs_mask, full_blocks):
    """Kernel: accumulate sum(sqrt((x-y)^2 + eps)) into an (8,128) block/core."""
    n_chunks = tile_r // chunk_r

    def kernel(x_ref, y_ref, o_ref):
        c = pl.program_id(0)   # core / parallel axis
        i = pl.program_id(1)   # reduction axis over row-blocks

        @pl.when(i == 0)
        def _init():
            o_ref[...] = jnp.zeros_like(o_ref)

        def tile_sum(masked):
            def chunk_sum(k, acc):
                if n_chunks == 1:
                    off = 0
                    xs = x_ref[...]
                    ys = y_ref[...]
                else:
                    off = pl.multiple_of(k * chunk_r, chunk_r)
                    xs = x_ref[pl.ds(off, chunk_r), :]
                    ys = y_ref[pl.ds(off, chunk_r), :]
                d = xs.astype(jnp.float32) - ys.astype(jnp.float32)
                v = jnp.sqrt(d * d + eps)          # eps is a Python float literal
                if masked:
                    row = jax.lax.broadcasted_iota(jnp.int32, (chunk_r, LANE), 0)
                    grow = (c * inner_blocks + i) * tile_r + off + row
                    v = jnp.where(grow < rows, v, 0.0)
                # VPU-only fold of the chunk into one (8, 128) vreg group.
                return acc + jnp.sum(v.reshape(chunk_r // 8, 8, LANE), axis=0)

            acc0 = jnp.zeros((8, LANE), jnp.float32)
            if n_chunks == 1:
                return chunk_sum(0, acc0)
            return jax.lax.fori_loop(0, n_chunks, chunk_sum, acc0, unroll=True)

        if needs_mask:
            gb = c * inner_blocks + i

            @pl.when(gb < full_blocks)          # fully in-range block: fast path
            def _full():
                o_ref[...] += tile_sum(masked=False)

            @pl.when(gb >= full_blocks)         # boundary / out-of-range block
            def _partial():
                o_ref[...] += tile_sum(masked=True)
        else:
            o_ref[...] += tile_sum(masked=False)

    return kernel


def _charbonnier_sum_2d(x2d, y2d, eps, rows, num_cores, tile_r_max, vmem_limit):
    """Sum of sqrt((x-y)^2 + eps) over a (rows, 128) lane-dense slab."""
    # Tile-row selection: biggest tile that fits the per-generation budget,
    # kept a multiple of 8 (and of CHUNK_R when large enough for chunking).
    if rows >= tile_r_max:
        tile_r = tile_r_max
    else:
        tile_r = max(8, (rows // 8) * 8)
        if tile_r >= CHUNK_R:
            tile_r = (tile_r // CHUNK_R) * CHUNK_R
    chunk_r = CHUNK_R if (tile_r >= CHUNK_R and tile_r % CHUNK_R == 0) else tile_r

    total_blocks = pl.cdiv(rows, tile_r)
    num_cores = max(1, min(num_cores, total_blocks))
    inner_blocks = pl.cdiv(total_blocks, num_cores)
    even_split = (num_cores * inner_blocks == total_blocks)
    needs_mask = (rows % tile_r != 0) or (not even_split)
    full_blocks = rows // tile_r

    if even_split:
        def in_map(c, i):
            return (c * inner_blocks + i, 0)
    else:
        def in_map(c, i):
            # Clamp so out-of-range cores re-read a valid block; its
            # contribution is zeroed by the in-kernel mask.
            return (jnp.minimum(c * inner_blocks + i, total_blocks - 1), 0)

    kernel = _make_charbonnier_kernel(eps, rows, tile_r, chunk_r, inner_blocks,
                                      needs_mask, full_blocks)

    n = rows * LANE
    cost = pl.CostEstimate(
        flops=5 * n,
        transcendentals=n,
        bytes_accessed=n * (x2d.dtype.itemsize + y2d.dtype.itemsize)
        + num_cores * 8 * LANE * 4,
    )

    cp_kwargs = dict(dimension_semantics=("parallel", "arbitrary"))
    if vmem_limit is not None:
        cp_kwargs["vmem_limit_bytes"] = vmem_limit

    partials = pl.pallas_call(
        kernel,
        out_shape=jax.ShapeDtypeStruct((num_cores * 8, LANE), jnp.float32),
        grid_spec=pltpu.PrefetchScalarGridSpec(
            num_scalar_prefetch=0,
            grid=(num_cores, inner_blocks),
            in_specs=[
                pl.BlockSpec((tile_r, LANE), in_map),
                pl.BlockSpec((tile_r, LANE), in_map),
            ],
            out_specs=pl.BlockSpec((8, LANE), lambda c, i: (c, 0)),
        ),
        compiler_params=pltpu.CompilerParams(**cp_kwargs),
        cost_estimate=cost,
    )(x2d, y2d)
    return jnp.sum(partials)


def charbonnier_loss(x, y, eps=1e-6):
    """Charbonnier loss matching the PyTorch module: (mean(sqrt((x-y)^2 + eps)), None)."""
    assert x.shape == y.shape
    n_elem = int(x.size)
    eps = float(eps)

    num_cores, tile_r_max, vmem_limit = _device_config()

    x_flat = x.reshape(-1)
    y_flat = y.reshape(-1)

    total = jnp.float32(0.0)

    if n_elem % LANE == 0 and n_elem >= 8 * LANE:
        # Zero-copy path: free metadata reshape to (rows, 128); any partial
        # trailing row-block is clipped by Pallas and masked in-kernel.
        rows = n_elem // LANE
        total = _charbonnier_sum_2d(
            x_flat.reshape(rows, LANE), y_flat.reshape(rows, LANE),
            eps, rows, num_cores, tile_r_max, vmem_limit)
    else:
        # TODO(synk): for n_elem % 128 != 0 the prefix slice below may be
        # materialized as an HBM copy by XLA; a fully sliceless path would
        # need 1-D blocks / manual DMA for the ragged tail.
        n_main = (n_elem // (8 * LANE)) * (8 * LANE)
        if n_main > 0:
            rows = n_main // LANE
            total = _charbonnier_sum_2d(
                x_flat[:n_main].reshape(rows, LANE),
                y_flat[:n_main].reshape(rows, LANE),
                eps, rows, num_cores, tile_r_max, vmem_limit)
        rem = n_elem - n_main
        if rem > 0:
            dt = (x_flat[n_main:].astype(jnp.float32)
                  - y_flat[n_main:].astype(jnp.float32))
            total = total + jnp.sum(jnp.sqrt(dt * dt + jnp.float32(eps)))

    loss = total / jnp.float32(n_elem)
    return (loss, None)


if __name__ == "__main__":
    key = jax.random.PRNGKey(0)
    kx, ky = jax.random.split(key)

    # NCHW inputs, small shape (2048 elements -> zero-copy kernel path).
    x = jax.random.normal(kx, (2, 4, 16, 16), dtype=jnp.float32)
    y = jax.random.normal(ky, (2, 4, 16, 16), dtype=jnp.float32)

    loss, aux = charbonnier_loss(x, y, eps=1e-6)
    loss = jax.block_until_ready(loss)

    diff = x - y
    ref = jnp.mean(jnp.sqrt(diff * diff + jnp.float32(1e-6)))
    assert aux is None
    assert jnp.allclose(loss, ref, rtol=1e-5, atol=1e-6), (loss, ref)

    # Ragged element count (1155 % 128 != 0): prefix-slab kernel + JAX tail.
    xr = jax.random.normal(kx, (3, 5, 7, 11), dtype=jnp.float32)
    yr = jax.random.normal(ky, (3, 5, 7, 11), dtype=jnp.float32)
    loss_r, _ = charbonnier_loss(xr, yr, eps=1e-6)
    loss_r = jax.block_until_ready(loss_r)
    dr = xr - yr
    ref_r = jnp.mean(jnp.sqrt(dr * dr + jnp.float32(1e-6)))
    assert jnp.allclose(loss_r, ref_r, rtol=1e-5, atol=1e-6), (loss_r, ref_r)

    # 1280 elements: n % 128 == 0 but rows % 8 != 0 -> exercises the in-kernel
    # boundary-block mask on the zero-copy path.
    xm = jax.random.normal(kx, (5, 2, 8, 16), dtype=jnp.float32)
    ym = jax.random.normal(ky, (5, 2, 8, 16), dtype=jnp.float32)
    loss_m, _ = charbonnier_loss(xm, ym, eps=1e-6)
    loss_m = jax.block_until_ready(loss_m)
    dm = xm - ym
    ref_m = jnp.mean(jnp.sqrt(dm * dm + jnp.float32(1e-6)))
    assert jnp.allclose(loss_m, ref_m, rtol=1e-5, atol=1e-6), (loss_m, ref_m)

    print("KERNEL_OK")
</pallas_src>

<mosaic_0001>
module attributes {stable_mosaic.version = 11 : i64} {
  func.func @kernel(%arg0: i32, %arg1: i32, %arg2: memref<16x128xf32, #tpu.memory_space<vmem>>, %arg3: memref<16x128xf32, #tpu.memory_space<vmem>>, %arg4: memref<8x128xf32, #tpu.memory_space<vmem>>) attributes {dimension_semantics = [#tpu.dimension_semantics<parallel>, #tpu.dimension_semantics<arbitrary>], iteration_bounds = array<i64: 1, 1>, scalar_prefetch = 0 : i64, scratch_operands = 0 : i64, tpu.core_type = #tpu.core_type<tc>, window_params = [{transform_indices = @transform_0, window_bounds = array<i64: 16, 128>}, {transform_indices = @transform_1, window_bounds = array<i64: 16, 128>}, {transform_indices = @transform_2, window_bounds = array<i64: 8, 128>}]} {
    %c0_i32 = arith.constant 0 : i32
    %0 = arith.cmpi eq, %arg1, %c0_i32 : i32
    %1 = arith.extui %0 : i1 to i32
    %c0_i32_0 = arith.constant 0 : i32
    %2 = arith.cmpi ne, %1, %c0_i32_0 : i32
    scf.if %2 {
      %cst_10 = arith.constant 0.000000e+00 : f32
      %17 = vector.broadcast %cst_10 : f32 to vector<8x128xf32>
      %c0_11 = arith.constant 0 : index
      %c0_12 = arith.constant 0 : index
      %18 = vector.load %arg4[%c0_11, %c0_12] : memref<8x128xf32, #tpu.memory_space<vmem>>, vector<8x128xf32>
      tpu.vector_store %arg4[%c0_11, %c0_12], %17 {strides = array<i32>} : memref<8x128xf32, #tpu.memory_space<vmem>>, vector<8x128xf32>,
    } else {
    }
    %c0 = arith.constant 0 : index
    %c0_1 = arith.constant 0 : index
    %3 = vector.load %arg4[%c0, %c0_1] : memref<8x128xf32, #tpu.memory_space<vmem>>, vector<8x128xf32>
    %cst = arith.constant 0.000000e+00 : f32
    %4 = vector.broadcast %cst : f32 to vector<8x128xf32>
    %c0_2 = arith.constant 0 : index
    %c0_3 = arith.constant 0 : index
    %5 = vector.load %arg2[%c0_2, %c0_3] : memref<16x128xf32, #tpu.memory_space<vmem>>, vector<16x128xf32>
    %c0_4 = arith.constant 0 : index
    %c0_5 = arith.constant 0 : index
    %6 = vector.load %arg3[%c0_4, %c0_5] : memref<16x128xf32, #tpu.memory_space<vmem>>, vector<16x128xf32>
    %7 = arith.subf %5, %6 : vector<16x128xf32>
    %8 = arith.mulf %7, %7 : vector<16x128xf32>
    %cst_6 = arith.constant 9.99999997E-7 : f32
    %9 = vector.broadcast %cst_6 : f32 to vector<16x128xf32>
    %10 = arith.addf %8, %9 : vector<16x128xf32>
    %11 = math.sqrt %10 : vector<16x128xf32>
    %12 = vector.shape_cast %11 : vector<16x128xf32> to vector<2x8x128xf32>
    %cst_7 = arith.constant dense<0.000000e+00> : vector<8x128xf32>
    %13 = vector.multi_reduction <add>, %12, %cst_7 [0] : vector<2x8x128xf32> to vector<8x128xf32>
    %14 = arith.addf %4, %13 : vector<8x128xf32>
    %15 = arith.addf %3, %14 : vector<8x128xf32>
    %c0_8 = arith.constant 0 : index
    %c0_9 = arith.constant 0 : index
    %16 = vector.load %arg4[%c0_8, %c0_9] : memref<8x128xf32, #tpu.memory_space<vmem>>, vector<8x128xf32>
    tpu.vector_store %arg4[%c0_8, %c0_9], %15 {strides = array<i32>} : memref<8x128xf32, #tpu.memory_space<vmem>>, vector<8x128xf32>,
    return
  }
  func.func @transform_0(%arg0: i32, %arg1: i32) -> (i32, i32) {
    %c1_i32 = arith.constant 1 : i32
    %0 = arith.muli %arg0, %c1_i32 : i32
    %1 = arith.addi %0, %arg1 : i32
    %c0_i32 = arith.constant 0 : i32
    %c0_i32_0 = arith.constant 0 : i32
    return %1, %c0_i32 : i32, i32
  }
  func.func @transform_1(%arg0: i32, %arg1: i32) -> (i32, i32) {
    %c1_i32 = arith.constant 1 : i32
    %0 = arith.muli %arg0, %c1_i32 : i32
    %1 = arith.addi %0, %arg1 : i32
    %c0_i32 = arith.constant 0 : i32
    %c0_i32_0 = arith.constant 0 : i32
    return %1, %c0_i32 : i32, i32
  }
  func.func @transform_2(%arg0: i32, %arg1: i32) -> (i32, i32) {
    %c0_i32 = arith.constant 0 : i32
    %c0_i32_0 = arith.constant 0 : i32
    return %arg0, %c0_i32 : i32, i32
  }
}

</mosaic_0001>

<llo_original>
// kernel: tpu_custom_call.1
$region0: #{tpu_custom_call.1}
  #allocation0 [shape = 'u32[]', space=smem, size = 0x4, offset = 0x4, fixed_abs, tag = 'smem constant byte address 0x4 - core index']
  #allocation1 [shape = 'u32[144,128]{1,0:T(1,128)}', space=vmem, size = 0x12000, scoped, tag = 'internal scratch']
  %s0 = inlined_call_operand.hbm [shape: f32[16,128], index: 0, kind: input, shape index: {}]
  %s1 = inlined_call_operand.hbm [shape: f32[16,128], index: 1, kind: input, shape index: {}]
  %s2 = inlined_call_operand.hbm [shape: f32[8,128], index: 2, kind: output, shape index: {}]
  %s3 = sld [smem:[#allocation0]]
  $region30: #{tpu_custom_call.1} parent=0
    _
  %s5 = ssub.s32 1, %s3
  %s6 = scalar_select 0, %s5, %s3
  $region1: #{tpu_custom_call.1} parent=0
    #allocation2 [shape = 'u8[8192]{0}', space=vmem, size = 0x2000, scoped, tag = 'input window, operand 0, single buffered']
    #allocation3 [shape = 's32[1]{0}', space=sflag, size = 0x4, scoped, tag = 'scoped memory for tpu_custom_call.1']
    #allocation4 [shape = 's32[1]{0}', space=sflag, size = 0x4, scoped, tag = 'scoped memory for tpu_custom_call.1']
    #allocation5 [shape = 'u8[8192]{0}', space=vmem, size = 0x2000, scoped, tag = 'input window, operand 1, single buffered']
    #allocation6 [shape = 's32[1]{0}', space=sflag, size = 0x4, scoped, tag = 'scoped memory for tpu_custom_call.1']
    #allocation7 [shape = 'u8[4096]{0}', space=vmem, size = 0x1000, scoped, tag = 'output window, operand 0, single buffered']
    %7 = vsyncpa [#allocation3], 0
    %8 = vsyncpa [#allocation6], 0
    %9 = vsyncpa [#allocation4], 0
    // Predicated region
    $region2: #{tpu_custom_call.1} parent=1 // pred_check
      _
    $region3: #{tpu_custom_call.1} parent=1 // pred_check_branch
      %11 = sbr.rel (0) target = $region5
    $region4: #{tpu_custom_call.1} parent=1 // pred_region
      %s12 = sadd.s32 0, 0
      %s13 = smul.u32 2, %s12
      %s15 = ssub.s32 256, 256
      %16 = vsyncadd [#allocation3], %s15
      %s17 = smul.addr %s13, 128
      %s18 = scalar_lea.hbm %s0, %s17
      %s19 = sshll.u32 [#allocation2], 4
      %s20 = int_to_ptr.vmem [resolvable:$true] %s19
      %25 = dma.hbm_to_vmem [thread:$0]  %s18, 256, %s20, [#allocation3], 128, 128, 8
    $region5: #{tpu_custom_call.1} parent=1 // pred_fallthru
      _
    // Predicated region
    $region6: #{tpu_custom_call.1} parent=1 // pred_check
      _
    $region7: #{tpu_custom_call.1} parent=1 // pred_check_branch
      %27 = sbr.rel (0) target = $region9
    $region8: #{tpu_custom_call.1} parent=1 // pred_region
      %s28 = sadd.s32 0, 0
      %s29 = smul.u32 2, %s28
      %s31 = ssub.s32 256, 256
      %32 = vsyncadd [#allocation6], %s31
      %s33 = smul.addr %s29, 128
      %s34 = scalar_lea.hbm %s1, %s33
      %s35 = sshll.u32 [#allocation5], 4
      %s36 = int_to_ptr.vmem [resolvable:$true] %s35
      %41 = dma.hbm_to_vmem [thread:$0]  %s34, 256, %s36, [#allocation6], 128, 128, 8
    $region9: #{tpu_custom_call.1} parent=1 // pred_fallthru
      _
    // Predicated region
    $region10: #{tpu_custom_call.1} parent=1 // pred_check
      _
    $region11: #{tpu_custom_call.1} parent=1 // pred_check_branch
      %43 = sbr.rel (0) target = $region13
    $region12: #{tpu_custom_call.1} parent=1 // pred_region
      %44 = dma.done [#allocation3], 256
    $region13: #{tpu_custom_call.1} parent=1 // pred_fallthru
      _
    // Predicated region
    $region14: #{tpu_custom_call.1} parent=1 // pred_check
      _
    $region15: #{tpu_custom_call.1} parent=1 // pred_check_branch
      %46 = sbr.rel (0) target = $region17
    $region16: #{tpu_custom_call.1} parent=1 // pred_region
      %47 = dma.done [#allocation6], 256
    $region17: #{tpu_custom_call.1} parent=1 // pred_fallthru
      _
    %s48 = sadd.s32 0, 0
    %s49 = smul.u32 2, %s48
    %s50 = sadd.s32 0, 0
    %s51 = smul.u32 2, %s50
    %p52 = scmp.eq.s32.totalorder 0, 0
    // Predicated region
    $region18: #{tpu_custom_call.1} parent=1 // pred_check
      %p53 = pneg %p52
    $region19: #{tpu_custom_call.1} parent=1 // pred_check_branch
      %55 = sbr.rel (%p53) target = $region21
    $region20: #{tpu_custom_call.1} parent=1 // pred_region
      %56 = vst [vmem:[#allocation7] sm:$0xff] 0.0
    $region21: #{tpu_custom_call.1} parent=1 // pred_fallthru
      _
    %v57 = vld [vmem:[#allocation7] sm:$0xff]
    %v58 = vld [vmem:[#allocation2] sm:$0xff]
    %v59 = vld [vmem:[#allocation2 + $0x8] sm:$0xff]
    %v60 = vld [vmem:[#allocation5] sm:$0xff]
    %v61 = vld [vmem:[#allocation5 + $0x8] sm:$0xff]
    %v62 = vsub.f32 %v58, %v60
    %v63 = vsub.f32 %v59, %v61
    %v64 = vmul.f32 %v62, %v62
    %v65 = vmul.f32 %v63, %v63
    %v66 = vadd.f32 %v64, 1e-06
    %v67 = vadd.f32 %v65, 1e-06
    %v68 = vrsqrt.pop %v66
    %v69 = vmul.f32 %v66, %v68
    %vm70 = vcmp.eq.f32.partialorder %v66, inf
    %v71 = vsel %vm70, %v66, %v69
    %vm72 = vcmp.eq.f32.partialorder %v66, 0.0
    %v73 = vand.u32 %v66, 2147483648
    %v74 = vsel %vm72, %v73, %v71
    %v75 = vrsqrt.pop %v67
    %v76 = vmul.f32 %v67, %v75
    %vm77 = vcmp.eq.f32.partialorder %v67, inf
    %v78 = vsel %vm77, %v67, %v76
    %vm79 = vcmp.eq.f32.partialorder %v67, 0.0
    %v80 = vand.u32 %v67, 2147483648
    %v81 = vsel %vm79, %v80, %v78
    %v82 = vadd.f32 %v74, %v81
    %v83 = vadd.f32 %v82, 0.0
    %v84 = vadd.f32 %v57, %v83
    %85 = vst [vmem:[#allocation7] sm:$0xff] %v84
    // Predicated region
    $region22: #{tpu_custom_call.1} parent=1 // pred_check
      _
    $region23: #{tpu_custom_call.1} parent=1 // pred_check_branch
      %87 = sbr.rel (0) target = $region25
    $region24: #{tpu_custom_call.1} parent=1 // pred_region
      %s89 = ssub.s32 128, 128
      %90 = vsyncadd [#allocation4], %s89
      %s92 = sshll.u32 [#allocation7], 4
      %s93 = int_to_ptr.vmem [resolvable:$true] %s92
      %95 = dma.vmem_to_hbm [thread:$0]  %s93, 128, %s2, [#allocation4]
    $region25: #{tpu_custom_call.1} parent=1 // pred_fallthru
      _
    // Predicated region
    $region26: #{tpu_custom_call.1} parent=1 // pred_check
      _
    $region27: #{tpu_custom_call.1} parent=1 // pred_check_branch
      %97 = sbr.rel (0) target = $region29
    $region28: #{tpu_custom_call.1} parent=1 // pred_region
      %98 = dma.done [#allocation4], 128
    $region29: #{tpu_custom_call.1} parent=1 // pred_fallthru
      _
    %99 = vsyncpa [#allocation3], 1
    %100 = vsyncpa [#allocation6], 1
    %101 = vsyncpa [#allocation4], 1

</llo_original>
